<compile_context>
chip_gen: v7x
topology: tpu7x:2x2x1
jax: 0.10.0
libtpu: 0.0.40
codegen_flags: <defaults>
</compile_context>

<pallas_src>
import functools

import jax
import jax.numpy as jnp
from jax.experimental import pallas as pl
from jax.experimental.pallas import tpu as pltpu


LANE = 128


def _round_up(x, m):
    return (x + m - 1) // m * m


def _pad2d(a, rows, cols):
    r, c = a.shape
    return jnp.pad(a, ((0, rows - r), (0, cols - c)))


def mlp_kernel(x_ref, w1_ref, wh_ref, wout_ref, bh_ref, bout_ref, o_ref):
    """One batch tile through the whole MLP.

    x_ref    : (TM, F)           activations tile (f32 or bf16)
    w1_ref   : (F, 128)          fc1 weight (in, out), zero-padded to 128 lanes
    wh_ref   : (4, 128, 128)     fc2..fc5 weights stacked, zero-padded
    wout_ref : (128, OUT_PAD)    out-layer weight, zero-padded
    bh_ref   : (5, 128)          fc1..fc5 biases stacked (f32)
    bout_ref : (1, OUT_PAD)      out-layer bias (f32)
    o_ref    : (TM, OUT_PAD)     output tile (f32)
    """
    bh = bh_ref[...]                                        # (5, 128) f32

    # fc1 + relu : (TM, F) @ (F, 128)  -> f32 accumulation on the MXU.
    h = jnp.dot(x_ref[...], w1_ref[...], preferred_element_type=jnp.float32)
    h = jnp.maximum(h + bh[0:1, :], 0.0)

    # fc2..fc5 + relu : (TM, 128) @ (128, 128), weights resident in VMEM.
    for i in range(4):
        h = jnp.dot(h.astype(wh_ref.dtype), wh_ref[i],
                    preferred_element_type=jnp.float32)
        h = jnp.maximum(h + bh[i + 1:i + 2, :], 0.0)

    # out layer: no activation.
    o_ref[...] = (jnp.dot(h.astype(wout_ref.dtype), wout_ref[...],
                          preferred_element_type=jnp.float32)
                  + bout_ref[...])


@functools.partial(jax.jit,
                   static_argnames=("n_output", "compute_dtype", "block_rows"))
def mlp_forward(x, params, n_output,
                compute_dtype=jnp.float32, block_rows=512):
    """x: (B, ...) e.g. NCHW; flattened to (B, n_features) like torch.flatten(1).

    params: dict name -> (W, b) with W stored as (in_features, out_features),
    i.e. y = x @ W + b (equivalent to torch's x @ W.T + b).
    """
    B = x.shape[0]
    x2 = x.reshape(B, -1).astype(compute_dtype)             # flatten(start_dim=1)
    F = x2.shape[1]
    out_pad = _round_up(n_output, LANE)

    # ---- pad & stack parameters (tiny; traced once per jit cache entry) ----
    w1, _ = params["fc1"]
    w1p = _pad2d(w1.astype(compute_dtype), F, LANE)          # (F, 128)

    hidden_names = ["fc2", "fc3", "fc4", "fc5"]
    wh = jnp.stack([_pad2d(params[n][0].astype(compute_dtype), LANE, LANE)
                    for n in hidden_names])                  # (4, 128, 128)

    wout, bout = params["out"]
    woutp = _pad2d(wout.astype(compute_dtype), LANE, out_pad)  # (128, out_pad)

    bh = jnp.stack([jnp.pad(params[n][1].astype(jnp.float32),
                            (0, LANE - params[n][1].shape[0]))
                    for n in ["fc1"] + hidden_names])        # (5, 128)
    boutp = jnp.pad(bout.astype(jnp.float32),
                    (0, out_pad - n_output)).reshape(1, out_pad)

    # ---- batch tiling: full batch if small, else block_rows with edge block ----
    tm = B if B <= block_rows else block_rows
    grid = (pl.cdiv(B, tm),)

    def const_spec(shape):
        # Same block every grid step -> stays VMEM-resident (no re-DMA).
        return pl.BlockSpec(shape, lambda i, s=shape: tuple(0 for _ in s))

    out = pl.pallas_call(
        mlp_kernel,
        out_shape=jax.ShapeDtypeStruct((B, out_pad), jnp.float32),
        grid=grid,
        in_specs=[
            pl.BlockSpec((tm, F), lambda i: (i, 0)),         # streamed x tile
            const_spec(w1p.shape),
            const_spec(wh.shape),
            const_spec(woutp.shape),
            const_spec(bh.shape),
            const_spec(boutp.shape),
        ],
        out_specs=pl.BlockSpec((tm, out_pad), lambda i: (i, 0)),
        compiler_params=pltpu.CompilerParams(
            dimension_semantics=("parallel",)),               # megacore on v7x
    )(x2, w1p, wh, woutp, bh, boutp)

    return out[:B, :n_output]


def init_params(key, n_features, n_output):
    """Deterministic init mimicking torch.nn.Linear defaults
    (uniform(-1/sqrt(fan_in), 1/sqrt(fan_in))). Weights stored as (in, out)."""
    dims = [n_features, 100, 50, 50, 50, 10, n_output]
    names = ["fc1", "fc2", "fc3", "fc4", "fc5", "out"]
    params = {}
    for i, name in enumerate(names):
        fan_in, fan_out = dims[i], dims[i + 1]
        key, kw, kb = jax.random.split(key, 3)
        bound = 1.0 / (fan_in ** 0.5)
        w = jax.random.uniform(kw, (fan_in, fan_out), jnp.float32, -bound, bound)
        b = jax.random.uniform(kb, (fan_out,), jnp.float32, -bound, bound)
        params[name] = (w, b)
    return params


def reference_forward(x, params, n_output):
    """Plain-JAX reference for sanity checking."""
    h = x.reshape(x.shape[0], -1).astype(jnp.float32)
    for name in ["fc1", "fc2", "fc3", "fc4", "fc5"]:
        w, b = params[name]
        h = jnp.maximum(h @ w + b, 0.0)
    w, b = params["out"]
    return h @ w + b


if __name__ == "__main__":
    key = jax.random.PRNGKey(0)
    kx, kp = jax.random.split(key)

    # Small, forward-consistent shapes: batch=2, channels=4, spatial=16x16
    # -> n_features = 4*16*16 = 1024 after flatten; n_output = 5.
    B, C, H, W = 2, 4, 16, 16
    n_output = 5
    x = jax.random.normal(kx, (B, C, H, W), dtype=jnp.float32)
    params = init_params(kp, C * H * W, n_output)

    # f32 path, small batch (single full-batch block).
    y = mlp_forward(x, params, n_output)
    jax.block_until_ready(y)
    y_ref = reference_forward(x, params, n_output)
    assert y.shape == (B, n_output), y.shape
    assert jnp.allclose(y, y_ref, atol=1e-4, rtol=1e-4), "f32 mismatch vs reference"

    # f32 path, larger batch: exercises the batch grid + edge block (1030 % 512 != 0).
    B2 = 1030
    xb = jax.random.normal(kx, (B2, C, H, W), dtype=jnp.float32)
    yb = mlp_forward(xb, params, n_output)
    jax.block_until_ready(yb)
    yb_ref = reference_forward(xb, params, n_output)
    assert yb.shape == (B2, n_output), yb.shape
    assert jnp.allclose(yb, yb_ref, atol=1e-4, rtol=1e-4), "gridded f32 mismatch"

    # bf16-operand path (f32 accumulation): looser tolerance vs f32 reference.
    yb16 = mlp_forward(xb, params, n_output, compute_dtype=jnp.bfloat16)
    jax.block_until_ready(yb16)
    assert jnp.allclose(yb16, yb_ref, atol=5e-2, rtol=5e-2), "bf16 mismatch"

    print("KERNEL_OK")
</pallas_src>

<mosaic_0001>
module attributes {stable_mosaic.version = 11 : i64} {
  func.func @mlp_kernel(%arg0: i32, %arg1: memref<2x1024xf32, #tpu.memory_space<vmem>>, %arg2: memref<1024x128xf32, #tpu.memory_space<vmem>>, %arg3: memref<4x128x128xf32, #tpu.memory_space<vmem>>, %arg4: memref<128x128xf32, #tpu.memory_space<vmem>>, %arg5: memref<5x128xf32, #tpu.memory_space<vmem>>, %arg6: memref<1x128xf32, #tpu.memory_space<vmem>>, %arg7: memref<2x128xf32, #tpu.memory_space<vmem>>) attributes {dimension_semantics = [#tpu.dimension_semantics<parallel>], iteration_bounds = array<i64: 1>, scalar_prefetch = 0 : i64, scratch_operands = 0 : i64, tpu.core_type = #tpu.core_type<tc>, window_params = [{transform_indices = @transform_0, window_bounds = array<i64: 2, 1024>}, {pipeline_mode = #tpu.pipeline_mode<synchronous>, transform_indices = @transform_1, window_bounds = array<i64: 1024, 128>}, {pipeline_mode = #tpu.pipeline_mode<synchronous>, transform_indices = @transform_2, window_bounds = array<i64: 4, 128, 128>}, {pipeline_mode = #tpu.pipeline_mode<synchronous>, transform_indices = @transform_3, window_bounds = array<i64: 128, 128>}, {pipeline_mode = #tpu.pipeline_mode<synchronous>, transform_indices = @transform_4, window_bounds = array<i64: 5, 128>}, {pipeline_mode = #tpu.pipeline_mode<synchronous>, transform_indices = @transform_5, window_bounds = array<i64: 1, 128>}, {transform_indices = @transform_6, window_bounds = array<i64: 2, 128>}]} {
    %c0 = arith.constant 0 : index
    %c0_0 = arith.constant 0 : index
    %0 = vector.load %arg5[%c0, %c0_0] : memref<5x128xf32, #tpu.memory_space<vmem>>, vector<5x128xf32>
    %c0_1 = arith.constant 0 : index
    %c0_2 = arith.constant 0 : index
    %1 = vector.load %arg1[%c0_1, %c0_2] : memref<2x1024xf32, #tpu.memory_space<vmem>>, vector<2x1024xf32>
    %c0_3 = arith.constant 0 : index
    %c0_4 = arith.constant 0 : index
    %2 = vector.load %arg2[%c0_3, %c0_4] : memref<1024x128xf32, #tpu.memory_space<vmem>>, vector<1024x128xf32>
    %cst = arith.constant dense<0.000000e+00> : vector<2x128xf32>
    %3 = tpu.matmul %1, %2, %cst {dimension_numbers = #tpu.dot_dimension_numbers<[1], [0], [0], [1], [0, 0, 1, 1], [], []>} : vector<2x1024xf32>, vector<1024x128xf32>, vector<2x128xf32> -> vector<2x128xf32>
    %4 = vector.extract_strided_slice %0 {offsets = [0, 0], sizes = [1, 128], strides = [1, 1]} : vector<5x128xf32> to vector<1x128xf32>
    %5 = vector.broadcast %4 : vector<1x128xf32> to vector<2x128xf32>
    %6 = arith.addf %3, %5 : vector<2x128xf32>
    %cst_5 = arith.constant 0.000000e+00 : f32
    %7 = vector.broadcast %cst_5 : f32 to vector<2x128xf32>
    %8 = arith.maximumf %6, %7 : vector<2x128xf32>
    %c0_6 = arith.constant 0 : index
    %c0_7 = arith.constant 0 : index
    %c0_8 = arith.constant 0 : index
    %9 = vector.load %arg3[%c0_6, %c0_7, %c0_8] : memref<4x128x128xf32, #tpu.memory_space<vmem>>, vector<1x128x128xf32>
    %10 = vector.shape_cast %9 : vector<1x128x128xf32> to vector<128x128xf32>
    %cst_9 = arith.constant dense<0.000000e+00> : vector<2x128xf32>
    %11 = tpu.matmul %8, %10, %cst_9 {dimension_numbers = #tpu.dot_dimension_numbers<[1], [0], [0], [1], [0, 0, 1, 1], [], []>} : vector<2x128xf32>, vector<128x128xf32>, vector<2x128xf32> -> vector<2x128xf32>
    %12 = vector.extract_strided_slice %0 {offsets = [1, 0], sizes = [1, 128], strides = [1, 1]} : vector<5x128xf32> to vector<1x128xf32>
    %13 = vector.broadcast %12 : vector<1x128xf32> to vector<2x128xf32>
    %14 = arith.addf %11, %13 : vector<2x128xf32>
    %cst_10 = arith.constant 0.000000e+00 : f32
    %15 = vector.broadcast %cst_10 : f32 to vector<2x128xf32>
    %16 = arith.maximumf %14, %15 : vector<2x128xf32>
    %c1 = arith.constant 1 : index
    %c0_11 = arith.constant 0 : index
    %c0_12 = arith.constant 0 : index
    %17 = vector.load %arg3[%c1, %c0_11, %c0_12] : memref<4x128x128xf32, #tpu.memory_space<vmem>>, vector<1x128x128xf32>
    %18 = vector.shape_cast %17 : vector<1x128x128xf32> to vector<128x128xf32>
    %cst_13 = arith.constant dense<0.000000e+00> : vector<2x128xf32>
    %19 = tpu.matmul %16, %18, %cst_13 {dimension_numbers = #tpu.dot_dimension_numbers<[1], [0], [0], [1], [0, 0, 1, 1], [], []>} : vector<2x128xf32>, vector<128x128xf32>, vector<2x128xf32> -> vector<2x128xf32>
    %20 = vector.extract_strided_slice %0 {offsets = [2, 0], sizes = [1, 128], strides = [1, 1]} : vector<5x128xf32> to vector<1x128xf32>
    %21 = vector.broadcast %20 : vector<1x128xf32> to vector<2x128xf32>
    %22 = arith.addf %19, %21 : vector<2x128xf32>
    %cst_14 = arith.constant 0.000000e+00 : f32
    %23 = vector.broadcast %cst_14 : f32 to vector<2x128xf32>
    %24 = arith.maximumf %22, %23 : vector<2x128xf32>
    %c2 = arith.constant 2 : index
    %c0_15 = arith.constant 0 : index
    %c0_16 = arith.constant 0 : index
    %25 = vector.load %arg3[%c2, %c0_15, %c0_16] : memref<4x128x128xf32, #tpu.memory_space<vmem>>, vector<1x128x128xf32>
    %26 = vector.shape_cast %25 : vector<1x128x128xf32> to vector<128x128xf32>
    %cst_17 = arith.constant dense<0.000000e+00> : vector<2x128xf32>
    %27 = tpu.matmul %24, %26, %cst_17 {dimension_numbers = #tpu.dot_dimension_numbers<[1], [0], [0], [1], [0, 0, 1, 1], [], []>} : vector<2x128xf32>, vector<128x128xf32>, vector<2x128xf32> -> vector<2x128xf32>
    %28 = vector.extract_strided_slice %0 {offsets = [3, 0], sizes = [1, 128], strides = [1, 1]} : vector<5x128xf32> to vector<1x128xf32>
    %29 = vector.broadcast %28 : vector<1x128xf32> to vector<2x128xf32>
    %30 = arith.addf %27, %29 : vector<2x128xf32>
    %cst_18 = arith.constant 0.000000e+00 : f32
    %31 = vector.broadcast %cst_18 : f32 to vector<2x128xf32>
    %32 = arith.maximumf %30, %31 : vector<2x128xf32>
    %c3 = arith.constant 3 : index
    %c0_19 = arith.constant 0 : index
    %c0_20 = arith.constant 0 : index
    %33 = vector.load %arg3[%c3, %c0_19, %c0_20] : memref<4x128x128xf32, #tpu.memory_space<vmem>>, vector<1x128x128xf32>
    %34 = vector.shape_cast %33 : vector<1x128x128xf32> to vector<128x128xf32>
    %cst_21 = arith.constant dense<0.000000e+00> : vector<2x128xf32>
    %35 = tpu.matmul %32, %34, %cst_21 {dimension_numbers = #tpu.dot_dimension_numbers<[1], [0], [0], [1], [0, 0, 1, 1], [], []>} : vector<2x128xf32>, vector<128x128xf32>, vector<2x128xf32> -> vector<2x128xf32>
    %36 = vector.extract_strided_slice %0 {offsets = [4, 0], sizes = [1, 128], strides = [1, 1]} : vector<5x128xf32> to vector<1x128xf32>
    %37 = vector.broadcast %36 : vector<1x128xf32> to vector<2x128xf32>
    %38 = arith.addf %35, %37 : vector<2x128xf32>
    %cst_22 = arith.constant 0.000000e+00 : f32
    %39 = vector.broadcast %cst_22 : f32 to vector<2x128xf32>
    %40 = arith.maximumf %38, %39 : vector<2x128xf32>
    %c0_23 = arith.constant 0 : index
    %c0_24 = arith.constant 0 : index
    %41 = vector.load %arg4[%c0_23, %c0_24] : memref<128x128xf32, #tpu.memory_space<vmem>>, vector<128x128xf32>
    %cst_25 = arith.constant dense<0.000000e+00> : vector<2x128xf32>
    %42 = tpu.matmul %40, %41, %cst_25 {dimension_numbers = #tpu.dot_dimension_numbers<[1], [0], [0], [1], [0, 0, 1, 1], [], []>} : vector<2x128xf32>, vector<128x128xf32>, vector<2x128xf32> -> vector<2x128xf32>
    %c0_26 = arith.constant 0 : index
    %c0_27 = arith.constant 0 : index
    %43 = vector.load %arg6[%c0_26, %c0_27] : memref<1x128xf32, #tpu.memory_space<vmem>>, vector<1x128xf32>
    %44 = vector.broadcast %43 : vector<1x128xf32> to vector<2x128xf32>
    %45 = arith.addf %42, %44 : vector<2x128xf32>
    %c0_28 = arith.constant 0 : index
    %c0_29 = arith.constant 0 : index
    %46 = vector.load %arg7[%c0_28, %c0_29] : memref<2x128xf32, #tpu.memory_space<vmem>>, vector<2x128xf32>
    tpu.vector_store %arg7[%c0_28, %c0_29], %45 {strides = array<i32>} : memref<2x128xf32, #tpu.memory_space<vmem>>, vector<2x128xf32>,
    return
  }
  func.func @transform_0(%arg0: i32) -> (i32, i32) {
    %c0_i32 = arith.constant 0 : i32
    %c0_i32_0 = arith.constant 0 : i32
    return %arg0, %c0_i32 : i32, i32
  }
  func.func @transform_1(%arg0: i32) -> (i32, i32) {
    %c0_i32 = arith.constant 0 : i32
    %c0_i32_0 = arith.constant 0 : i32
    %c0_i32_1 = arith.constant 0 : i32
    return %c0_i32, %c0_i32_0 : i32, i32
  }
  func.func @transform_2(%arg0: i32) -> (i32, i32, i32) {
    %c0_i32 = arith.constant 0 : i32
    %c0_i32_0 = arith.constant 0 : i32
    %c0_i32_1 = arith.constant 0 : i32
    %c0_i32_2 = arith.constant 0 : i32
    return %c0_i32, %c0_i32_0, %c0_i32_1 : i32, i32, i32
  }
  func.func @transform_3(%arg0: i32) -> (i32, i32) {
    %c0_i32 = arith.constant 0 : i32
    %c0_i32_0 = arith.constant 0 : i32
    %c0_i32_1 = arith.constant 0 : i32
    return %c0_i32, %c0_i32_0 : i32, i32
  }
  func.func @transform_4(%arg0: i32) -> (i32, i32) {
    %c0_i32 = arith.constant 0 : i32
    %c0_i32_0 = arith.constant 0 : i32
    %c0_i32_1 = arith.constant 0 : i32
    return %c0_i32, %c0_i32_0 : i32, i32
  }
  func.func @transform_5(%arg0: i32) -> (i32, i32) {
    %c0_i32 = arith.constant 0 : i32
    %c0_i32_0 = arith.constant 0 : i32
    %c0_i32_1 = arith.constant 0 : i32
    return %c0_i32, %c0_i32_0 : i32, i32
  }
  func.func @transform_6(%arg0: i32) -> (i32, i32) {
    %c0_i32 = arith.constant 0 : i32
    %c0_i32_0 = arith.constant 0 : i32
    return %arg0, %c0_i32 : i32, i32
  }
}

</mosaic_0001>

<llo_original>
// kernel: mlp_forward.1
$region0: #{mlp_forward.1}
  #allocation0 [shape = 'u32[]', space=smem, size = 0x4, offset = 0x4, fixed_abs, tag = 'smem constant byte address 0x4 - core index']
  #allocation1 [shape = 'u32[144,128]{1,0:T(1,128)}', space=vmem, size = 0x12000, scoped, tag = 'internal scratch']
  %s0 = inlined_call_operand.vmem [shape: f32[2,1024], index: 0, kind: input, shape index: {}]
  %s1 = inlined_call_operand.vmem [shape: f32[1024,128], index: 1, kind: input, shape index: {}]
  %s2 = inlined_call_operand.vmem [shape: f32[4,128,128], index: 2, kind: input, shape index: {}]
  %s3 = inlined_call_operand.vmem [shape: f32[128,128], index: 3, kind: input, shape index: {}]
  %s4 = inlined_call_operand.vmem [shape: f32[5,128], index: 4, kind: input, shape index: {}]
  %s5 = inlined_call_operand.vmem [shape: f32[1,128], index: 5, kind: input, shape index: {}]
  %s6 = inlined_call_operand.hbm [shape: f32[2,128], index: 6, kind: output, shape index: {}]
  %s7 = sld [smem:[#allocation0]]
  $region34: #{mlp_forward.1} parent=0
    _
  %s9 = ssub.s32 1, %s7
  %s10 = scalar_select 0, %s9, %s7
  $region1: #{mlp_forward.1} parent=0
    #allocation2 [shape = 'u8[1024]{0}', space=vmem, size = 0x400, scoped, tag = 'output window, operand 0, single buffered']
    #allocation3 [shape = 's32[1]{0}', space=sflag, size = 0x4, scoped, tag = 'scoped memory for mlp_forward.1']
    %11 = vsyncpa [#allocation3], 0
    // Predicated region
    $region2: #{mlp_forward.1} parent=1 // pred_check
      _
    $region3: #{mlp_forward.1} parent=1 // pred_check_branch
      %13 = sbr.rel (0) target = $region5
    $region4: #{mlp_forward.1} parent=1 // pred_region
      _
    $region5: #{mlp_forward.1} parent=1 // pred_fallthru
      _
    // Predicated region
    $region6: #{mlp_forward.1} parent=1 // pred_check
      _
    $region7: #{mlp_forward.1} parent=1 // pred_check_branch
      %15 = sbr.rel (0) target = $region9
    $region8: #{mlp_forward.1} parent=1 // pred_region
      _
    $region9: #{mlp_forward.1} parent=1 // pred_fallthru
      _
    // Predicated region
    $region10: #{mlp_forward.1} parent=1 // pred_check
      _
    $region11: #{mlp_forward.1} parent=1 // pred_check_branch
      %17 = sbr.rel (0) target = $region13
    $region12: #{mlp_forward.1} parent=1 // pred_region
      _
    $region13: #{mlp_forward.1} parent=1 // pred_fallthru
      _
    // Predicated region
    $region14: #{mlp_forward.1} parent=1 // pred_check
      _
    $region15: #{mlp_forward.1} parent=1 // pred_check_branch
      %19 = sbr.rel (0) target = $region17
    $region16: #{mlp_forward.1} parent=1 // pred_region
      _
    $region17: #{mlp_forward.1} parent=1 // pred_fallthru
      _
    // Predicated region
    $region18: #{mlp_forward.1} parent=1 // pred_check
      _
    $region19: #{mlp_forward.1} parent=1 // pred_check_branch
      %21 = sbr.rel (0) target = $region21
    $region20: #{mlp_forward.1} parent=1 // pred_region
      _
    $region21: #{mlp_forward.1} parent=1 // pred_fallthru
      _
    // Predicated region
    $region22: #{mlp_forward.1} parent=1 // pred_check
      _
    $region23: #{mlp_forward.1} parent=1 // pred_check_branch
      %23 = sbr.rel (0) target = $region25
    $region24: #{mlp_forward.1} parent=1 // pred_region
      _
    $region25: #{mlp_forward.1} parent=1 // pred_fallthru
      _
    %v24 = vld [vmem:[%s4] sm:$0x1f]
    %v25 = vld [vmem:[%s0] sm:$0xff]
    %v26 = vld [vmem:[%s0 + $0x8] sm:$0xff]
    %v27 = vld [vmem:[%s1] sm:$0xff]
    %v28 = vld [vmem:[%s1 + $0x8] sm:$0xff]
    %v29 = vld [vmem:[%s1 + $0x10] sm:$0xff]
    %v30 = vld [vmem:[%s1 + $0x18] sm:$0xff]
    %v31 = vld [vmem:[%s1 + $0x20] sm:$0xff]
    %v32 = vld [vmem:[%s1 + $0x28] sm:$0xff]
    %v33 = vld [vmem:[%s1 + $0x30] sm:$0xff]
    %v34 = vld [vmem:[%s1 + $0x38] sm:$0xff]
    %v35 = vld [vmem:[%s1 + $0x40] sm:$0xff]
    %v36 = vld [vmem:[%s1 + $0x48] sm:$0xff]
    %v37 = vld [vmem:[%s1 + $0x50] sm:$0xff]
    %v38 = vld [vmem:[%s1 + $0x58] sm:$0xff]
    %v39 = vld [vmem:[%s1 + $0x60] sm:$0xff]
    %v40 = vld [vmem:[%s1 + $0x68] sm:$0xff]
    %v41 = vld [vmem:[%s1 + $0x70] sm:$0xff]
    %v42 = vld [vmem:[%s1 + $0x78] sm:$0xff]
    %v43 = vld [vmem:[%s1 + $0x80] sm:$0xff]
    %v44 = vld [vmem:[%s1 + $0x88] sm:$0xff]
    %v45 = vld [vmem:[%s1 + $0x90] sm:$0xff]
    %v46 = vld [vmem:[%s1 + $0x98] sm:$0xff]
    %v47 = vld [vmem:[%s1 + $0xa0] sm:$0xff]
    %v48 = vld [vmem:[%s1 + $0xa8] sm:$0xff]
    %v49 = vld [vmem:[%s1 + $0xb0] sm:$0xff]
    %v50 = vld [vmem:[%s1 + $0xb8] sm:$0xff]
    %v51 = vld [vmem:[%s1 + $0xc0] sm:$0xff]
    %v52 = vld [vmem:[%s1 + $0xc8] sm:$0xff]
    %v53 = vld [vmem:[%s1 + $0xd0] sm:$0xff]
    %v54 = vld [vmem:[%s1 + $0xd8] sm:$0xff]
    %v55 = vld [vmem:[%s1 + $0xe0] sm:$0xff]
    %v56 = vld [vmem:[%s1 + $0xe8] sm:$0xff]
    %v57 = vld [vmem:[%s1 + $0xf0] sm:$0xff]
    %v58 = vld [vmem:[%s1 + $0xf8] sm:$0xff]
    %v59 = vld [vmem:[%s1 + $0x100] sm:$0xff]
    %v60 = vld [vmem:[%s1 + $0x108] sm:$0xff]
    %v61 = vld [vmem:[%s1 + $0x110] sm:$0xff]
    %v62 = vld [vmem:[%s1 + $0x118] sm:$0xff]
    %v63 = vld [vmem:[%s1 + $0x120] sm:$0xff]
    %v64 = vld [vmem:[%s1 + $0x128] sm:$0xff]
    %v65 = vld [vmem:[%s1 + $0x130] sm:$0xff]
    %v66 = vld [vmem:[%s1 + $0x138] sm:$0xff]
    %v67 = vld [vmem:[%s1 + $0x140] sm:$0xff]
    %v68 = vld [vmem:[%s1 + $0x148] sm:$0xff]
    %v69 = vld [vmem:[%s1 + $0x150] sm:$0xff]
    %v70 = vld [vmem:[%s1 + $0x158] sm:$0xff]
    %v71 = vld [vmem:[%s1 + $0x160] sm:$0xff]
    %v72 = vld [vmem:[%s1 + $0x168] sm:$0xff]
    %v73 = vld [vmem:[%s1 + $0x170] sm:$0xff]
    %v74 = vld [vmem:[%s1 + $0x178] sm:$0xff]
    %v75 = vld [vmem:[%s1 + $0x180] sm:$0xff]
    %v76 = vld [vmem:[%s1 + $0x188] sm:$0xff]
    %v77 = vld [vmem:[%s1 + $0x190] sm:$0xff]
    %v78 = vld [vmem:[%s1 + $0x198] sm:$0xff]
    %v79 = vld [vmem:[%s1 + $0x1a0] sm:$0xff]
    %v80 = vld [vmem:[%s1 + $0x1a8] sm:$0xff]
    %v81 = vld [vmem:[%s1 + $0x1b0] sm:$0xff]
    %v82 = vld [vmem:[%s1 + $0x1b8] sm:$0xff]
    %v83 = vld [vmem:[%s1 + $0x1c0] sm:$0xff]
    %v84 = vld [vmem:[%s1 + $0x1c8] sm:$0xff]
    %v85 = vld [vmem:[%s1 + $0x1d0] sm:$0xff]
    %v86 = vld [vmem:[%s1 + $0x1d8] sm:$0xff]
    %v87 = vld [vmem:[%s1 + $0x1e0] sm:$0xff]
    %v88 = vld [vmem:[%s1 + $0x1e8] sm:$0xff]
    %v89 = vld [vmem:[%s1 + $0x1f0] sm:$0xff]
    %v90 = vld [vmem:[%s1 + $0x1f8] sm:$0xff]
    %v91 = vld [vmem:[%s1 + $0x200] sm:$0xff]
    %v92 = vld [vmem:[%s1 + $0x208] sm:$0xff]
    %v93 = vld [vmem:[%s1 + $0x210] sm:$0xff]
    %v94 = vld [vmem:[%s1 + $0x218] sm:$0xff]
    %v95 = vld [vmem:[%s1 + $0x220] sm:$0xff]
    %v96 = vld [vmem:[%s1 + $0x228] sm:$0xff]
    %v97 = vld [vmem:[%s1 + $0x230] sm:$0xff]
    %v98 = vld [vmem:[%s1 + $0x238] sm:$0xff]
    %v99 = vld [vmem:[%s1 + $0x240] sm:$0xff]
    %v100 = vld [vmem:[%s1 + $0x248] sm:$0xff]
    %v101 = vld [vmem:[%s1 + $0x250] sm:$0xff]
    %v102 = vld [vmem:[%s1 + $0x258] sm:$0xff]
    %v103 = vld [vmem:[%s1 + $0x260] sm:$0xff]
    %v104 = vld [vmem:[%s1 + $0x268] sm:$0xff]
    %v105 = vld [vmem:[%s1 + $0x270] sm:$0xff]
    %v106 = vld [vmem:[%s1 + $0x278] sm:$0xff]
    %v107 = vld [vmem:[%s1 + $0x280] sm:$0xff]
    %v108 = vld [vmem:[%s1 + $0x288] sm:$0xff]
    %v109 = vld [vmem:[%s1 + $0x290] sm:$0xff]
    %v110 = vld [vmem:[%s1 + $0x298] sm:$0xff]
    %v111 = vld [vmem:[%s1 + $0x2a0] sm:$0xff]
    %v112 = vld [vmem:[%s1 + $0x2a8] sm:$0xff]
    %v113 = vld [vmem:[%s1 + $0x2b0] sm:$0xff]
    %v114 = vld [vmem:[%s1 + $0x2b8] sm:$0xff]
    %v115 = vld [vmem:[%s1 + $0x2c0] sm:$0xff]
    %v116 = vld [vmem:[%s1 + $0x2c8] sm:$0xff]
    %v117 = vld [vmem:[%s1 + $0x2d0] sm:$0xff]
    %v118 = vld [vmem:[%s1 + $0x2d8] sm:$0xff]
    %v119 = vld [vmem:[%s1 + $0x2e0] sm:$0xff]
    %v120 = vld [vmem:[%s1 + $0x2e8] sm:$0xff]
    %v121 = vld [vmem:[%s1 + $0x2f0] sm:$0xff]
    %v122 = vld [vmem:[%s1 + $0x2f8] sm:$0xff]
    %v123 = vld [vmem:[%s1 + $0x300] sm:$0xff]
    %v124 = vld [vmem:[%s1 + $0x308] sm:$0xff]
    %v125 = vld [vmem:[%s1 + $0x310] sm:$0xff]
    %v126 = vld [vmem:[%s1 + $0x318] sm:$0xff]
    %v127 = vld [vmem:[%s1 + $0x320] sm:$0xff]
    %v128 = vld [vmem:[%s1 + $0x328] sm:$0xff]
    %v129 = vld [vmem:[%s1 + $0x330] sm:$0xff]
    %v130 = vld [vmem:[%s1 + $0x338] sm:$0xff]
    %v131 = vld [vmem:[%s1 + $0x340] sm:$0xff]
    %v132 = vld [vmem:[%s1 + $0x348] sm:$0xff]
    %v133 = vld [vmem:[%s1 + $0x350] sm:$0xff]
    %v134 = vld [vmem:[%s1 + $0x358] sm:$0xff]
    %v135 = vld [vmem:[%s1 + $0x360] sm:$0xff]
    %v136 = vld [vmem:[%s1 + $0x368] sm:$0xff]
    %v137 = vld [vmem:[%s1 + $0x370] sm:$0xff]
    %v138 = vld [vmem:[%s1 + $0x378] sm:$0xff]
    %v139 = vld [vmem:[%s1 + $0x380] sm:$0xff]
    %v140 = vld [vmem:[%s1 + $0x388] sm:$0xff]
    %v141 = vld [vmem:[%s1 + $0x390] sm:$0xff]
    %v142 = vld [vmem:[%s1 + $0x398] sm:$0xff]
    %v143 = vld [vmem:[%s1 + $0x3a0] sm:$0xff]
    %v144 = vld [vmem:[%s1 + $0x3a8] sm:$0xff]
    %v145 = vld [vmem:[%s1 + $0x3b0] sm:$0xff]
    %v146 = vld [vmem:[%s1 + $0x3b8] sm:$0xff]
    %v147 = vld [vmem:[%s1 + $0x3c0] sm:$0xff]
    %v148 = vld [vmem:[%s1 + $0x3c8] sm:$0xff]
    %v149 = vld [vmem:[%s1 + $0x3d0] sm:$0xff]
    %v150 = vld [vmem:[%s1 + $0x3d8] sm:$0xff]
    %v151 = vld [vmem:[%s1 + $0x3e0] sm:$0xff]
    %v152 = vld [vmem:[%s1 + $0x3e8] sm:$0xff]
    %v153 = vld [vmem:[%s1 + $0x3f0] sm:$0xff]
    %v154 = vld [vmem:[%s1 + $0x3f8] sm:$0xff]
    %v155 = vlaneseq
    %v156 = vshrl.u32 %v155, 7
    %v157 = vsub.s32 0, %v156
    %v158 = vrot.slane %v24, %v157
    %v161 = vcombine.high %v25, %v25
    %v163 = vunpack.c.l.s4 1983009808
    %v164 = vunpack.c.0.s8 %v163
    %v165 = vlaneseq
    %v166 = vshrl.u32 %v165, 7
    %v167 = vsub.s32 %v164, %v166
    %v168 = vrot.slane %v25, %v167
    %v170 = vunpack.c.l.s4 1983009808
    %v171 = vunpack.c.0.s8 %v170
    %v172 = vlaneseq
    %v173 = vshrl.u32 %v172, 7
    %v174 = vsub.s32 %v171, %v173
    %v175 = vrot.slane %v161, %v174
    %v176 = vcombine.high %v168, %v168
    %v177 = vcombine.high %v175, %v175
    %v178 = vcombine.high %v26, %v26
    %v180 = vunpack.c.l.s4 1983009808
    %v181 = vunpack.c.0.s8 %v180
    %v182 = vlaneseq
    %v183 = vshrl.u32 %v182, 7
    %v184 = vsub.s32 %v181, %v183
    %v185 = vrot.slane %v26, %v184
    %v187 = vunpack.c.l.s4 1983009808
    %v188 = vunpack.c.0.s8 %v187
    %v189 = vlaneseq
    %v190 = vshrl.u32 %v189, 7
    %v191 = vsub.s32 %v188, %v190
    %v192 = vrot.slane %v178, %v191
    %v193 = vcombine.high %v185, %v185
    %v194 = vcombine.high %v192, %v192
    %203 = vmatprep.subr.mxu0 0.0
    %204 = vmatpush1.msra.mxu0 %v27
    %205 = vmatprep.subr.mxu0 0.0
    %206 = vmatpush1.msra.mxu0 %v28
    %207 = vmatprep.subr.mxu0 0.0
    %208 = vmatpush1.msra.mxu0 %v29
    %209 = vmatprep.subr.mxu0 0.0
    %210 = vmatpush1.msra.mxu0 %v30
    %211 = vmatprep.subr.mxu0 0.0
    %212 = vmatpush1.msra.mxu0 %v31
    %213 = vmatprep.subr.mxu0 0.0
    %214 = vmatpush1.msra.mxu0 %v32
    %215 = vmatprep.subr.mxu0 0.0
    %216 = vmatpush1.msra.mxu0 %v33
    %217 = vmatprep.subr.mxu0 0.0
    %218 = vmatpush1.msra.mxu0 %v34
    %219 = vmatprep.subr.mxu0 0.0
    %220 = vmatpush1.msra.mxu0 %v35
    %221 = vmatprep.subr.mxu0 0.0
    %222 = vmatpush1.msra.mxu0 %v36
    %223 = vmatprep.subr.mxu0 0.0
    %224 = vmatpush1.msra.mxu0 %v37
    %225 = vmatprep.subr.mxu0 0.0
    %226 = vmatpush1.msra.mxu0 %v38
    %227 = vmatprep.subr.mxu0 0.0
    %228 = vmatpush1.msra.mxu0 %v39
    %229 = vmatprep.subr.mxu0 0.0
    %230 = vmatpush1.msra.mxu0 %v40
    %231 = vmatprep.subr.mxu0 0.0
    %232 = vmatpush1.msra.mxu0 %v41
    %233 = vmatprep.subr.mxu0 0.0
    %234 = vmatpush1.msra.mxu0 %v42
    %235 = vmatprep.subr.mxu0 0.0
    %236 = vmatpush1.msra.mxu0 %v43
    %237 = vmatprep.subr.mxu0 0.0
    %238 = vmatpush1.msra.mxu0 %v44
    %239 = vmatprep.subr.mxu0 0.0
    %240 = vmatpush1.msra.mxu0 %v45
    %241 = vmatprep.subr.mxu0 0.0
    %242 = vmatpush1.msra.mxu0 %v46
    %243 = vmatprep.subr.mxu0 0.0
    %244 = vmatpush1.msra.mxu0 %v47
    %245 = vmatprep.subr.mxu0 0.0
    %246 = vmatpush1.msra.mxu0 %v48
    %247 = vmatprep.subr.mxu0 0.0
    %248 = vmatpush1.msra.mxu0 %v49
    %249 = vmatprep.subr.mxu0 0.0
    %250 = vmatpush1.msra.mxu0 %v50
    %251 = vmatprep.subr.mxu0 0.0
    %252 = vmatpush1.msra.mxu0 %v51
    %253 = vmatprep.subr.mxu0 0.0
    %254 = vmatpush1.msra.mxu0 %v52
    %255 = vmatprep.subr.mxu0 0.0
    %256 = vmatpush1.msra.mxu0 %v53
    %257 = vmatprep.subr.mxu0 0.0
    %258 = vmatpush1.msra.mxu0 %v54
    %259 = vmatprep.subr.mxu0 0.0
    %260 = vmatpush1.msra.mxu0 %v55
    %261 = vmatprep.subr.mxu0 0.0
    %262 = vmatpush1.msra.mxu0 %v56
    %263 = vmatprep.subr.mxu0 0.0
    %264 = vmatpush1.msra.mxu0 %v57
    %265 = vmatprep.subr.mxu0 0.0
    %266 = vmatpush1.msra.mxu0 %v58
    %267 = vmatprep.mubr.f32.mxu0 %v176
    %268 = vmatmul.mubr.f32.gmra.mrb[0].mxu0 %v168
    %v269 = vpop.f32.mrb[0].mxu0
    %v270 = vadd.f32 %v158, %v269
    %v271 = vpop.f32.mrb[0].mxu0
    %272 = vdwg.mxu0
    %273 = vmatprep.subr.mxu0 0.0
    %274 = vmatpush1.msra.mxu0 %v59
    %275 = vmatprep.subr.mxu0 0.0
    %276 = vmatpush1.msra.mxu0 %v60
    %277 = vmatprep.subr.mxu0 0.0
    %278 = vmatpush1.msra.mxu0 %v61
    %279 = vmatprep.subr.mxu0 0.0
    %280 = vmatpush1.msra.mxu0 %v62
    %281 = vmatprep.subr.mxu0 0.0
    %282 = vmatpush1.msra.mxu0 %v63
    %283 = vmatprep.subr.mxu0 0.0
    %284 = vmatpush1.msra.mxu0 %v64
    %285 = vmatprep.subr.mxu0 0.0
    %286 = vmatpush1.msra.mxu0 %v65
    %287 = vmatprep.subr.mxu0 0.0
    %288 = vmatpush1.msra.mxu0 %v66
    %289 = vmatprep.subr.mxu0 0.0
    %290 = vmatpush1.msra.mxu0 %v67
    %291 = vmatprep.subr.mxu0 0.0
    %292 = vmatpush1.msra.mxu0 %v68
    %293 = vmatprep.subr.mxu0 0.0
    %294 = vmatpush1.msra.mxu0 %v69
    %295 = vmatprep.subr.mxu0 0.0
    %296 = vmatpush1.msra.mxu0 %v70
    %297 = vmatprep.subr.mxu0 0.0
    %298 = vmatpush1.msra.mxu0 %v71
    %299 = vmatprep.subr.mxu0 0.0
    %300 = vmatpush1.msra.mxu0 %v72
    %301 = vmatprep.subr.mxu0 0.0
    %302 = vmatpush1.msra.mxu0 %v73
    %303 = vmatprep.subr.mxu0 0.0
    %304 = vmatpush1.msra.mxu0 %v74
    %305 = vmatprep.subr.mxu0 0.0
    %306 = vmatpush1.msra.mxu0 %v75
    %307 = vmatprep.subr.mxu0 0.0
    %308 = vmatpush1.msra.mxu0 %v76
    %309 = vmatprep.subr.mxu0 0.0
    %310 = vmatpush1.msra.mxu0 %v77
    %311 = vmatprep.subr.mxu0 0.0
    %312 = vmatpush1.msra.mxu0 %v78
    %313 = vmatprep.subr.mxu0 0.0
    %314 = vmatpush1.msra.mxu0 %v79
    %315 = vmatprep.subr.mxu0 0.0
    %316 = vmatpush1.msra.mxu0 %v80
    %317 = vmatprep.subr.mxu0 0.0
    %318 = vmatpush1.msra.mxu0 %v81
    %319 = vmatprep.subr.mxu0 0.0
    %320 = vmatpush1.msra.mxu0 %v82
    %321 = vmatprep.subr.mxu0 0.0
    %322 = vmatpush1.msra.mxu0 %v83
    %323 = vmatprep.subr.mxu0 0.0
    %324 = vmatpush1.msra.mxu0 %v84
    %325 = vmatprep.subr.mxu0 0.0
    %326 = vmatpush1.msra.mxu0 %v85
    %327 = vmatprep.subr.mxu0 0.0
    %328 = vmatpush1.msra.mxu0 %v86
    %329 = vmatprep.subr.mxu0 0.0
    %330 = vmatpush1.msra.mxu0 %v87
    %331 = vmatprep.subr.mxu0 0.0
    %332 = vmatpush1.msra.mxu0 %v88
    %333 = vmatprep.subr.mxu0 0.0
    %334 = vmatpush1.msra.mxu0 %v89
    %335 = vmatprep.subr.mxu0 0.0
    %336 = vmatpush1.msra.mxu0 %v90
    %337 = vmatprep.mubr.f32.mxu0 %v177
    %338 = vmatmul.mubr.f32.gmra.mrb[0].mxu0 %v175
    %v339 = vpop.f32.mrb[0].mxu0
    %v340 = vadd.f32 %v270, %v339
    %v341 = vpop.f32.mrb[0].mxu0
    %342 = vdwg.mxu0
    %343 = vmatprep.subr.mxu0 0.0
    %344 = vmatpush1.msra.mxu0 %v91
    %345 = vmatprep.subr.mxu0 0.0
    %346 = vmatpush1.msra.mxu0 %v92
    %347 = vmatprep.subr.mxu0 0.0
    %348 = vmatpush1.msra.mxu0 %v93
    %349 = vmatprep.subr.mxu0 0.0
    %350 = vmatpush1.msra.mxu0 %v94
    %351 = vmatprep.subr.mxu0 0.0
    %352 = vmatpush1.msra.mxu0 %v95
    %353 = vmatprep.subr.mxu0 0.0
    %354 = vmatpush1.msra.mxu0 %v96
    %355 = vmatprep.subr.mxu0 0.0
    %356 = vmatpush1.msra.mxu0 %v97
    %357 = vmatprep.subr.mxu0 0.0
    %358 = vmatpush1.msra.mxu0 %v98
    %359 = vmatprep.subr.mxu0 0.0
    %360 = vmatpush1.msra.mxu0 %v99
    %361 = vmatprep.subr.mxu0 0.0
    %362 = vmatpush1.msra.mxu0 %v100
    %363 = vmatprep.subr.mxu0 0.0
    %364 = vmatpush1.msra.mxu0 %v101
    %365 = vmatprep.subr.mxu0 0.0
    %366 = vmatpush1.msra.mxu0 %v102
    %367 = vmatprep.subr.mxu0 0.0
    %368 = vmatpush1.msra.mxu0 %v103
    %369 = vmatprep.subr.mxu0 0.0
    %370 = vmatpush1.msra.mxu0 %v104
    %371 = vmatprep.subr.mxu0 0.0
    %372 = vmatpush1.msra.mxu0 %v105
    %373 = vmatprep.subr.mxu0 0.0
    %374 = vmatpush1.msra.mxu0 %v106
    %375 = vmatprep.subr.mxu0 0.0
    %376 = vmatpush1.msra.mxu0 %v107
    %377 = vmatprep.subr.mxu0 0.0
    %378 = vmatpush1.msra.mxu0 %v108
    %379 = vmatprep.subr.mxu0 0.0
    %380 = vmatpush1.msra.mxu0 %v109
    %381 = vmatprep.subr.mxu0 0.0
    %382 = vmatpush1.msra.mxu0 %v110
    %383 = vmatprep.subr.mxu0 0.0
    %384 = vmatpush1.msra.mxu0 %v111
    %385 = vmatprep.subr.mxu0 0.0
    %386 = vmatpush1.msra.mxu0 %v112
    %387 = vmatprep.subr.mxu0 0.0
    %388 = vmatpush1.msra.mxu0 %v113
    %389 = vmatprep.subr.mxu0 0.0
    %390 = vmatpush1.msra.mxu0 %v114
    %391 = vmatprep.subr.mxu0 0.0
    %392 = vmatpush1.msra.mxu0 %v115
    %393 = vmatprep.subr.mxu0 0.0
    %394 = vmatpush1.msra.mxu0 %v116
    %395 = vmatprep.subr.mxu0 0.0
    %396 = vmatpush1.msra.mxu0 %v117
    %397 = vmatprep.subr.mxu0 0.0
    %398 = vmatpush1.msra.mxu0 %v118
    %399 = vmatprep.subr.mxu0 0.0
    %400 = vmatpush1.msra.mxu0 %v119
    %401 = vmatprep.subr.mxu0 0.0
    %402 = vmatpush1.msra.mxu0 %v120
    %403 = vmatprep.subr.mxu0 0.0
    %404 = vmatpush1.msra.mxu0 %v121
    %405 = vmatprep.subr.mxu0 0.0
    %406 = vmatpush1.msra.mxu0 %v122
    %407 = vmatprep.mubr.f32.mxu0 %v193
    %408 = vmatmul.mubr.f32.gmra.mrb[0].mxu0 %v185
    %v409 = vpop.f32.mrb[0].mxu0
    %v410 = vadd.f32 %v340, %v409
    %v411 = vpop.f32.mrb[0].mxu0
    %412 = vdwg.mxu0
    %413 = vmatprep.subr.mxu0 0.0
    %414 = vmatpush1.msra.mxu0 %v123
    %415 = vmatprep.subr.mxu0 0.0
    %416 = vmatpush1.msra.mxu0 %v124
    %417 = vmatprep.subr.mxu0 0.0
    %418 = vmatpush1.msra.mxu0 %v125
    %419 = vmatprep.subr.mxu0 0.0
    %420 = vmatpush1.msra.mxu0 %v126
    %421 = vmatprep.subr.mxu0 0.0
    %422 = vmatpush1.msra.mxu0 %v127
    %423 = vmatprep.subr.mxu0 0.0
    %424 = vmatpush1.msra.mxu0 %v128
    %425 = vmatprep.subr.mxu0 0.0
    %426 = vmatpush1.msra.mxu0 %v129
    %427 = vmatprep.subr.mxu0 0.0
    %428 = vmatpush1.msra.mxu0 %v130
    %429 = vmatprep.subr.mxu0 0.0
    %430 = vmatpush1.msra.mxu0 %v131
    %431 = vmatprep.subr.mxu0 0.0
    %432 = vmatpush1.msra.mxu0 %v132
    %433 = vmatprep.subr.mxu0 0.0
    %434 = vmatpush1.msra.mxu0 %v133
    %435 = vmatprep.subr.mxu0 0.0
    %436 = vmatpush1.msra.mxu0 %v134
    %437 = vmatprep.subr.mxu0 0.0
    %438 = vmatpush1.msra.mxu0 %v135
    %439 = vmatprep.subr.mxu0 0.0
    %440 = vmatpush1.msra.mxu0 %v136
    %441 = vmatprep.subr.mxu0 0.0
    %442 = vmatpush1.msra.mxu0 %v137
    %443 = vmatprep.subr.mxu0 0.0
    %444 = vmatpush1.msra.mxu0 %v138
    %445 = vmatprep.subr.mxu0 0.0
    %446 = vmatpush1.msra.mxu0 %v139
    %447 = vmatprep.subr.mxu0 0.0
    %448 = vmatpush1.msra.mxu0 %v140
    %449 = vmatprep.subr.mxu0 0.0
    %450 = vmatpush1.msra.mxu0 %v141
    %451 = vmatprep.subr.mxu0 0.0
    %452 = vmatpush1.msra.mxu0 %v142
    %453 = vmatprep.subr.mxu0 0.0
    %454 = vmatpush1.msra.mxu0 %v143
    %455 = vmatprep.subr.mxu0 0.0
    %456 = vmatpush1.msra.mxu0 %v144
    %457 = vmatprep.subr.mxu0 0.0
    %458 = vmatpush1.msra.mxu0 %v145
    %459 = vmatprep.subr.mxu0 0.0
    %460 = vmatpush1.msra.mxu0 %v146
    %461 = vmatprep.subr.mxu0 0.0
    %462 = vmatpush1.msra.mxu0 %v147
    %463 = vmatprep.subr.mxu0 0.0
    %464 = vmatpush1.msra.mxu0 %v148
    %465 = vmatprep.subr.mxu0 0.0
    %466 = vmatpush1.msra.mxu0 %v149
    %467 = vmatprep.subr.mxu0 0.0
    %468 = vmatpush1.msra.mxu0 %v150
    %469 = vmatprep.subr.mxu0 0.0
    %470 = vmatpush1.msra.mxu0 %v151
    %471 = vmatprep.subr.mxu0 0.0
    %472 = vmatpush1.msra.mxu0 %v152
    %473 = vmatprep.subr.mxu0 0.0
    %474 = vmatpush1.msra.mxu0 %v153
    %475 = vmatprep.subr.mxu0 0.0
    %476 = vmatpush1.msra.mxu0 %v154
    %477 = vmatprep.mubr.f32.mxu0 %v194
    %478 = vmatmul.mubr.f32.gmra.mrb[0].mxu0 %v192
    %v479 = vpop.f32.mrb[0].mxu0
    %v480 = vadd.f32 %v410, %v479
    %v481 = vpop.f32.mrb[0].mxu0
    %482 = vdwg.mxu0
    %v483 = vmax.f32 %v480, 0.0
    %v484 = vld [vmem:[%s2] sm:$0xff]
    %v485 = vld [vmem:[%s2 + $0x8] sm:$0xff]
    %v486 = vld [vmem:[%s2 + $0x10] sm:$0xff]
    %v487 = vld [vmem:[%s2 + $0x18] sm:$0xff]
    %v488 = vld [vmem:[%s2 + $0x20] sm:$0xff]
    %v489 = vld [vmem:[%s2 + $0x28] sm:$0xff]
    %v490 = vld [vmem:[%s2 + $0x30] sm:$0xff]
    %v491 = vld [vmem:[%s2 + $0x38] sm:$0xff]
    %v492 = vld [vmem:[%s2 + $0x40] sm:$0xff]
    %v493 = vld [vmem:[%s2 + $0x48] sm:$0xff]
    %v494 = vld [vmem:[%s2 + $0x50] sm:$0xff]
    %v495 = vld [vmem:[%s2 + $0x58] sm:$0xff]
    %v496 = vld [vmem:[%s2 + $0x60] sm:$0xff]
    %v497 = vld [vmem:[%s2 + $0x68] sm:$0xff]
    %v498 = vld [vmem:[%s2 + $0x70] sm:$0xff]
    %v499 = vld [vmem:[%s2 + $0x78] sm:$0xff]
    %v500 = vlaneseq
    %v501 = vshrl.u32 %v500, 7
    %v502 = vsub.s32 1, %v501
    %v503 = vrot.slane %v24, %v502
    %504 = vmatprep.subr.mxu0 0.0
    %505 = vmatpush1.msra.mxu0 %v484
    %506 = vmatprep.subr.mxu0 0.0
    %507 = vmatpush1.msra.mxu0 %v485
    %508 = vmatprep.subr.mxu0 0.0
    %509 = vmatpush1.msra.mxu0 %v486
    %510 = vmatprep.subr.mxu0 0.0
    %511 = vmatpush1.msra.mxu0 %v487
    %512 = vmatprep.subr.mxu0 0.0
    %513 = vmatpush1.msra.mxu0 %v488
    %514 = vmatprep.subr.mxu0 0.0
    %515 = vmatpush1.msra.mxu0 %v489
    %516 = vmatprep.subr.mxu0 0.0
    %517 = vmatpush1.msra.mxu0 %v490
    %518 = vmatprep.subr.mxu0 0.0
    %519 = vmatpush1.msra.mxu0 %v491
    %520 = vmatprep.subr.mxu0 0.0
    %521 = vmatpush1.msra.mxu0 %v492
    %522 = vmatprep.subr.mxu0 0.0
    %523 = vmatpush1.msra.mxu0 %v493
    %524 = vmatprep.subr.mxu0 0.0
    %525 = vmatpush1.msra.mxu0 %v494
    %526 = vmatprep.subr.mxu0 0.0
    %527 = vmatpush1.msra.mxu0 %v495
    %528 = vmatprep.subr.mxu0 0.0
    %529 = vmatpush1.msra.mxu0 %v496
    %530 = vmatprep.subr.mxu0 0.0
    %531 = vmatpush1.msra.mxu0 %v497
    %532 = vmatprep.subr.mxu0 0.0
    %533 = vmatpush1.msra.mxu0 %v498
    %534 = vmatprep.subr.mxu0 0.0
    %535 = vmatpush1.msra.mxu0 %v499
    %536 = vmatprep.subr.mxu0 0.0
    %537 = vmatpush1.msra.mxu0 0.0
    %538 = vmatprep.subr.mxu0 0.0
    %539 = vmatpush1.msra.mxu0 0.0
    %540 = vmatprep.subr.mxu0 0.0
    %541 = vmatpush1.msra.mxu0 0.0
    %542 = vmatprep.subr.mxu0 0.0
    %543 = vmatpush1.msra.mxu0 0.0
    %544 = vmatprep.subr.mxu0 0.0
    %545 = vmatpush1.msra.mxu0 0.0
    %546 = vmatprep.subr.mxu0 0.0
    %547 = vmatpush1.msra.mxu0 0.0
    %548 = vmatprep.subr.mxu0 0.0
    %549 = vmatpush1.msra.mxu0 0.0
    %550 = vmatprep.subr.mxu0 0.0
    %551 = vmatpush1.msra.mxu0 0.0
    %552 = vmatprep.subr.mxu0 0.0
    %553 = vmatpush1.msra.mxu0 0.0
    %554 = vmatprep.subr.mxu0 0.0
    %555 = vmatpush1.msra.mxu0 0.0
    %556 = vmatprep.subr.mxu0 0.0
    %557 = vmatpush1.msra.mxu0 0.0
    %558 = vmatprep.subr.mxu0 0.0
    %559 = vmatpush1.msra.mxu0 0.0
    %560 = vmatprep.subr.mxu0 0.0
    %561 = vmatpush1.msra.mxu0 0.0
    %562 = vmatprep.subr.mxu0 0.0
    %563 = vmatpush1.msra.mxu0 0.0
    %564 = vmatprep.subr.mxu0 0.0
    %565 = vmatpush1.msra.mxu0 0.0
    %566 = vmatprep.subr.mxu0 0.0
    %567 = vmatpush1.msra.mxu0 0.0
    %568 = vmatprep.mubr.f32.mxu0 0.0
    %569 = vmatmul.mubr.f32.gmra.mrb[0].mxu0 %v483
    %v570 = vpop.f32.mrb[0].mxu0
    %v571 = vadd.f32 %v503, %v570
    %v572 = vpop.f32.mrb[0].mxu0
    %573 = vdwg.mxu0
    %v574 = vmax.f32 %v571, 0.0
    %s575 = scalar_lea.vmem %s2, 128
    %v576 = vld [vmem:[%s575] sm:$0xff]
    %v577 = vld [vmem:[%s575 + $0x8] sm:$0xff]
    %v578 = vld [vmem:[%s575 + $0x10] sm:$0xff]
    %v579 = vld [vmem:[%s575 + $0x18] sm:$0xff]
    %v580 = vld [vmem:[%s575 + $0x20] sm:$0xff]
    %v581 = vld [vmem:[%s575 + $0x28] sm:$0xff]
    %v582 = vld [vmem:[%s575 + $0x30] sm:$0xff]
    %v583 = vld [vmem:[%s575 + $0x38] sm:$0xff]
    %v584 = vld [vmem:[%s575 + $0x40] sm:$0xff]
    %v585 = vld [vmem:[%s575 + $0x48] sm:$0xff]
    %v586 = vld [vmem:[%s575 + $0x50] sm:$0xff]
    %v587 = vld [vmem:[%s575 + $0x58] sm:$0xff]
    %v588 = vld [vmem:[%s575 + $0x60] sm:$0xff]
    %v589 = vld [vmem:[%s575 + $0x68] sm:$0xff]
    %v590 = vld [vmem:[%s575 + $0x70] sm:$0xff]
    %v591 = vld [vmem:[%s575 + $0x78] sm:$0xff]
    %v592 = vlaneseq
    %v593 = vshrl.u32 %v592, 7
    %v594 = vsub.s32 2, %v593
    %v595 = vrot.slane %v24, %v594
    %596 = vmatprep.subr.mxu0 0.0
    %597 = vmatpush1.msra.mxu0 %v576
    %598 = vmatprep.subr.mxu0 0.0
    %599 = vmatpush1.msra.mxu0 %v577
    %600 = vmatprep.subr.mxu0 0.0
    %601 = vmatpush1.msra.mxu0 %v578
    %602 = vmatprep.subr.mxu0 0.0
    %603 = vmatpush1.msra.mxu0 %v579
    %604 = vmatprep.subr.mxu0 0.0
    %605 = vmatpush1.msra.mxu0 %v580
    %606 = vmatprep.subr.mxu0 0.0
    %607 = vmatpush1.msra.mxu0 %v581
    %608 = vmatprep.subr.mxu0 0.0
    %609 = vmatpush1.msra.mxu0 %v582
    %610 = vmatprep.subr.mxu0 0.0
    %611 = vmatpush1.msra.mxu0 %v583
    %612 = vmatprep.subr.mxu0 0.0
    %613 = vmatpush1.msra.mxu0 %v584
    %614 = vmatprep.subr.mxu0 0.0
    %615 = vmatpush1.msra.mxu0 %v585
    %616 = vmatprep.subr.mxu0 0.0
    %617 = vmatpush1.msra.mxu0 %v586
    %618 = vmatprep.subr.mxu0 0.0
    %619 = vmatpush1.msra.mxu0 %v587
    %620 = vmatprep.subr.mxu0 0.0
    %621 = vmatpush1.msra.mxu0 %v588
    %622 = vmatprep.subr.mxu0 0.0
    %623 = vmatpush1.msra.mxu0 %v589
    %624 = vmatprep.subr.mxu0 0.0
    %625 = vmatpush1.msra.mxu0 %v590
    %626 = vmatprep.subr.mxu0 0.0
    %627 = vmatpush1.msra.mxu0 %v591
    %628 = vmatprep.subr.mxu0 0.0
    %629 = vmatpush1.msra.mxu0 0.0
    %630 = vmatprep.subr.mxu0 0.0
    %631 = vmatpush1.msra.mxu0 0.0
    %632 = vmatprep.subr.mxu0 0.0
    %633 = vmatpush1.msra.mxu0 0.0
    %634 = vmatprep.subr.mxu0 0.0
    %635 = vmatpush1.msra.mxu0 0.0
    %636 = vmatprep.subr.mxu0 0.0
    %637 = vmatpush1.msra.mxu0 0.0
    %638 = vmatprep.subr.mxu0 0.0
    %639 = vmatpush1.msra.mxu0 0.0
    %640 = vmatprep.subr.mxu0 0.0
    %641 = vmatpush1.msra.mxu0 0.0
    %642 = vmatprep.subr.mxu0 0.0
    %643 = vmatpush1.msra.mxu0 0.0
    %644 = vmatprep.subr.mxu0 0.0
    %645 = vmatpush1.msra.mxu0 0.0
    %646 = vmatprep.subr.mxu0 0.0
    %647 = vmatpush1.msra.mxu0 0.0
    %648 = vmatprep.subr.mxu0 0.0
    %649 = vmatpush1.msra.mxu0 0.0
    %650 = vmatprep.subr.mxu0 0.0
    %651 = vmatpush1.msra.mxu0 0.0
    %652 = vmatprep.subr.mxu0 0.0
    %653 = vmatpush1.msra.mxu0 0.0
    %654 = vmatprep.subr.mxu0 0.0
    %655 = vmatpush1.msra.mxu0 0.0
    %656 = vmatprep.subr.mxu0 0.0
    %657 = vmatpush1.msra.mxu0 0.0
    %658 = vmatprep.subr.mxu0 0.0
    %659 = vmatpush1.msra.mxu0 0.0
    %660 = vmatprep.mubr.f32.mxu0 0.0
    %661 = vmatmul.mubr.f32.gmra.mrb[0].mxu0 %v574
    %v662 = vpop.f32.mrb[0].mxu0
    %v663 = vadd.f32 %v595, %v662
    %v664 = vpop.f32.mrb[0].mxu0
    %665 = vdwg.mxu0
    %v666 = vmax.f32 %v663, 0.0
    %s667 = scalar_lea.vmem %s2, 256
    %v668 = vld [vmem:[%s667] sm:$0xff]
    %v669 = vld [vmem:[%s667 + $0x8] sm:$0xff]
    %v670 = vld [vmem:[%s667 + $0x10] sm:$0xff]
    %v671 = vld [vmem:[%s667 + $0x18] sm:$0xff]
    %v672 = vld [vmem:[%s667 + $0x20] sm:$0xff]
    %v673 = vld [vmem:[%s667 + $0x28] sm:$0xff]
    %v674 = vld [vmem:[%s667 + $0x30] sm:$0xff]
    %v675 = vld [vmem:[%s667 + $0x38] sm:$0xff]
    %v676 = vld [vmem:[%s667 + $0x40] sm:$0xff]
    %v677 = vld [vmem:[%s667 + $0x48] sm:$0xff]
    %v678 = vld [vmem:[%s667 + $0x50] sm:$0xff]
    %v679 = vld [vmem:[%s667 + $0x58] sm:$0xff]
    %v680 = vld [vmem:[%s667 + $0x60] sm:$0xff]
    %v681 = vld [vmem:[%s667 + $0x68] sm:$0xff]
    %v682 = vld [vmem:[%s667 + $0x70] sm:$0xff]
    %v683 = vld [vmem:[%s667 + $0x78] sm:$0xff]
    %v684 = vlaneseq
    %v685 = vshrl.u32 %v684, 7
    %v686 = vsub.s32 3, %v685
    %v687 = vrot.slane %v24, %v686
    %688 = vmatprep.subr.mxu0 0.0
    %689 = vmatpush1.msra.mxu0 %v668
    %690 = vmatprep.subr.mxu0 0.0
    %691 = vmatpush1.msra.mxu0 %v669
    %692 = vmatprep.subr.mxu0 0.0
    %693 = vmatpush1.msra.mxu0 %v670
    %694 = vmatprep.subr.mxu0 0.0
    %695 = vmatpush1.msra.mxu0 %v671
    %696 = vmatprep.subr.mxu0 0.0
    %697 = vmatpush1.msra.mxu0 %v672
    %698 = vmatprep.subr.mxu0 0.0
    %699 = vmatpush1.msra.mxu0 %v673
    %700 = vmatprep.subr.mxu0 0.0
    %701 = vmatpush1.msra.mxu0 %v674
    %702 = vmatprep.subr.mxu0 0.0
    %703 = vmatpush1.msra.mxu0 %v675
    %704 = vmatprep.subr.mxu0 0.0
    %705 = vmatpush1.msra.mxu0 %v676
    %706 = vmatprep.subr.mxu0 0.0
    %707 = vmatpush1.msra.mxu0 %v677
    %708 = vmatprep.subr.mxu0 0.0
    %709 = vmatpush1.msra.mxu0 %v678
    %710 = vmatprep.subr.mxu0 0.0
    %711 = vmatpush1.msra.mxu0 %v679
    %712 = vmatprep.subr.mxu0 0.0
    %713 = vmatpush1.msra.mxu0 %v680
    %714 = vmatprep.subr.mxu0 0.0
    %715 = vmatpush1.msra.mxu0 %v681
    %716 = vmatprep.subr.mxu0 0.0
    %717 = vmatpush1.msra.mxu0 %v682
    %718 = vmatprep.subr.mxu0 0.0
    %719 = vmatpush1.msra.mxu0 %v683
    %720 = vmatprep.subr.mxu0 0.0
    %721 = vmatpush1.msra.mxu0 0.0
    %722 = vmatprep.subr.mxu0 0.0
    %723 = vmatpush1.msra.mxu0 0.0
    %724 = vmatprep.subr.mxu0 0.0
    %725 = vmatpush1.msra.mxu0 0.0
    %726 = vmatprep.subr.mxu0 0.0
    %727 = vmatpush1.msra.mxu0 0.0
    %728 = vmatprep.subr.mxu0 0.0
    %729 = vmatpush1.msra.mxu0 0.0
    %730 = vmatprep.subr.mxu0 0.0
    %731 = vmatpush1.msra.mxu0 0.0
    %732 = vmatprep.subr.mxu0 0.0
    %733 = vmatpush1.msra.mxu0 0.0
    %734 = vmatprep.subr.mxu0 0.0
    %735 = vmatpush1.msra.mxu0 0.0
    %736 = vmatprep.subr.mxu0 0.0
    %737 = vmatpush1.msra.mxu0 0.0
    %738 = vmatprep.subr.mxu0 0.0
    %739 = vmatpush1.msra.mxu0 0.0
    %740 = vmatprep.subr.mxu0 0.0
    %741 = vmatpush1.msra.mxu0 0.0
    %742 = vmatprep.subr.mxu0 0.0
    %743 = vmatpush1.msra.mxu0 0.0
    %744 = vmatprep.subr.mxu0 0.0
    %745 = vmatpush1.msra.mxu0 0.0
    %746 = vmatprep.subr.mxu0 0.0
    %747 = vmatpush1.msra.mxu0 0.0
    %748 = vmatprep.subr.mxu0 0.0
    %749 = vmatpush1.msra.mxu0 0.0
    %750 = vmatprep.subr.mxu0 0.0
    %751 = vmatpush1.msra.mxu0 0.0
    %752 = vmatprep.mubr.f32.mxu0 0.0
    %753 = vmatmul.mubr.f32.gmra.mrb[0].mxu0 %v666
    %v754 = vpop.f32.mrb[0].mxu0
    %v755 = vadd.f32 %v687, %v754
    %v756 = vpop.f32.mrb[0].mxu0
    %757 = vdwg.mxu0
    %v758 = vmax.f32 %v755, 0.0
    %s759 = scalar_lea.vmem %s2, 384
    %v760 = vld [vmem:[%s759] sm:$0xff]
    %v761 = vld [vmem:[%s759 + $0x8] sm:$0xff]
    %v762 = vld [vmem:[%s759 + $0x10] sm:$0xff]
    %v763 = vld [vmem:[%s759 + $0x18] sm:$0xff]
    %v764 = vld [vmem:[%s759 + $0x20] sm:$0xff]
    %v765 = vld [vmem:[%s759 + $0x28] sm:$0xff]
    %v766 = vld [vmem:[%s759 + $0x30] sm:$0xff]
    %v767 = vld [vmem:[%s759 + $0x38] sm:$0xff]
    %v768 = vld [vmem:[%s759 + $0x40] sm:$0xff]
    %v769 = vld [vmem:[%s759 + $0x48] sm:$0xff]
    %v770 = vld [vmem:[%s759 + $0x50] sm:$0xff]
    %v771 = vld [vmem:[%s759 + $0x58] sm:$0xff]
    %v772 = vld [vmem:[%s759 + $0x60] sm:$0xff]
    %v773 = vld [vmem:[%s759 + $0x68] sm:$0xff]
    %v774 = vld [vmem:[%s759 + $0x70] sm:$0xff]
    %v775 = vld [vmem:[%s759 + $0x78] sm:$0xff]
    %v776 = vlaneseq
    %v777 = vshrl.u32 %v776, 7
    %v778 = vsub.s32 4, %v777
    %v779 = vrot.slane %v24, %v778
    %780 = vmatprep.subr.mxu0 0.0
    %781 = vmatpush1.msra.mxu0 %v760
    %782 = vmatprep.subr.mxu0 0.0
    %783 = vmatpush1.msra.mxu0 %v761
    %784 = vmatprep.subr.mxu0 0.0
    %785 = vmatpush1.msra.mxu0 %v762
    %786 = vmatprep.subr.mxu0 0.0
    %787 = vmatpush1.msra.mxu0 %v763
    %788 = vmatprep.subr.mxu0 0.0
    %789 = vmatpush1.msra.mxu0 %v764
    %790 = vmatprep.subr.mxu0 0.0
    %791 = vmatpush1.msra.mxu0 %v765
    %792 = vmatprep.subr.mxu0 0.0
    %793 = vmatpush1.msra.mxu0 %v766
    %794 = vmatprep.subr.mxu0 0.0
    %795 = vmatpush1.msra.mxu0 %v767
    %796 = vmatprep.subr.mxu0 0.0
    %797 = vmatpush1.msra.mxu0 %v768
    %798 = vmatprep.subr.mxu0 0.0
    %799 = vmatpush1.msra.mxu0 %v769
    %800 = vmatprep.subr.mxu0 0.0
    %801 = vmatpush1.msra.mxu0 %v770
    %802 = vmatprep.subr.mxu0 0.0
    %803 = vmatpush1.msra.mxu0 %v771
    %804 = vmatprep.subr.mxu0 0.0
    %805 = vmatpush1.msra.mxu0 %v772
    %806 = vmatprep.subr.mxu0 0.0
    %807 = vmatpush1.msra.mxu0 %v773
    %808 = vmatprep.subr.mxu0 0.0
    %809 = vmatpush1.msra.mxu0 %v774
    %810 = vmatprep.subr.mxu0 0.0
    %811 = vmatpush1.msra.mxu0 %v775
    %812 = vmatprep.subr.mxu0 0.0
    %813 = vmatpush1.msra.mxu0 0.0
    %814 = vmatprep.subr.mxu0 0.0
    %815 = vmatpush1.msra.mxu0 0.0
    %816 = vmatprep.subr.mxu0 0.0
    %817 = vmatpush1.msra.mxu0 0.0
    %818 = vmatprep.subr.mxu0 0.0
    %819 = vmatpush1.msra.mxu0 0.0
    %820 = vmatprep.subr.mxu0 0.0
    %821 = vmatpush1.msra.mxu0 0.0
    %822 = vmatprep.subr.mxu0 0.0
    %823 = vmatpush1.msra.mxu0 0.0
    %824 = vmatprep.subr.mxu0 0.0
    %825 = vmatpush1.msra.mxu0 0.0
    %826 = vmatprep.subr.mxu0 0.0
    %827 = vmatpush1.msra.mxu0 0.0
    %828 = vmatprep.subr.mxu0 0.0
    %829 = vmatpush1.msra.mxu0 0.0
    %830 = vmatprep.subr.mxu0 0.0
    %831 = vmatpush1.msra.mxu0 0.0
    %832 = vmatprep.subr.mxu0 0.0
    %833 = vmatpush1.msra.mxu0 0.0
    %834 = vmatprep.subr.mxu0 0.0
    %835 = vmatpush1.msra.mxu0 0.0
    %836 = vmatprep.subr.mxu0 0.0
    %837 = vmatpush1.msra.mxu0 0.0
    %838 = vmatprep.subr.mxu0 0.0
    %839 = vmatpush1.msra.mxu0 0.0
    %840 = vmatprep.subr.mxu0 0.0
    %841 = vmatpush1.msra.mxu0 0.0
    %842 = vmatprep.subr.mxu0 0.0
    %843 = vmatpush1.msra.mxu0 0.0
    %844 = vmatprep.mubr.f32.mxu0 0.0
    %845 = vmatmul.mubr.f32.gmra.mrb[0].mxu0 %v758
    %v846 = vpop.f32.mrb[0].mxu0
    %v847 = vadd.f32 %v779, %v846
    %v848 = vpop.f32.mrb[0].mxu0
    %849 = vdwg.mxu0
    %v850 = vmax.f32 %v847, 0.0
    %v851 = vld [vmem:[%s3] sm:$0xff]
    %v852 = vld [vmem:[%s3 + $0x8] sm:$0xff]
    %v853 = vld [vmem:[%s3 + $0x10] sm:$0xff]
    %v854 = vld [vmem:[%s3 + $0x18] sm:$0xff]
    %v855 = vld [vmem:[%s3 + $0x20] sm:$0xff]
    %v856 = vld [vmem:[%s3 + $0x28] sm:$0xff]
    %v857 = vld [vmem:[%s3 + $0x30] sm:$0xff]
    %v858 = vld [vmem:[%s3 + $0x38] sm:$0xff]
    %v859 = vld [vmem:[%s3 + $0x40] sm:$0xff]
    %v860 = vld [vmem:[%s3 + $0x48] sm:$0xff]
    %v861 = vld [vmem:[%s3 + $0x50] sm:$0xff]
    %v862 = vld [vmem:[%s3 + $0x58] sm:$0xff]
    %v863 = vld [vmem:[%s3 + $0x60] sm:$0xff]
    %v864 = vld [vmem:[%s3 + $0x68] sm:$0xff]
    %v865 = vld [vmem:[%s3 + $0x70] sm:$0xff]
    %v866 = vld [vmem:[%s3 + $0x78] sm:$0xff]
    %v867 = vld [vmem:[%s5] sm:$0x1]
    %v869 = vlaneseq
    %v870 = vshrl.u32 %v869, 7
    %v871 = vsub.s32 0, %v870
    %v872 = vrot.slane %v867, %v871
    %874 = vmatprep.subr.mxu0 0.0
    %875 = vmatpush1.msra.mxu0 %v851
    %876 = vmatprep.subr.mxu0 0.0
    %877 = vmatpush1.msra.mxu0 %v852
    %878 = vmatprep.subr.mxu0 0.0
    %879 = vmatpush1.msra.mxu0 %v853
    %880 = vmatprep.subr.mxu0 0.0
    %881 = vmatpush1.msra.mxu0 %v854
    %882 = vmatprep.subr.mxu0 0.0
    %883 = vmatpush1.msra.mxu0 %v855
    %884 = vmatprep.subr.mxu0 0.0
    %885 = vmatpush1.msra.mxu0 %v856
    %886 = vmatprep.subr.mxu0 0.0
    %887 = vmatpush1.msra.mxu0 %v857
    %888 = vmatprep.subr.mxu0 0.0
    %889 = vmatpush1.msra.mxu0 %v858
    %890 = vmatprep.subr.mxu0 0.0
    %891 = vmatpush1.msra.mxu0 %v859
    %892 = vmatprep.subr.mxu0 0.0
    %893 = vmatpush1.msra.mxu0 %v860
    %894 = vmatprep.subr.mxu0 0.0
    %895 = vmatpush1.msra.mxu0 %v861
    %896 = vmatprep.subr.mxu0 0.0
    %897 = vmatpush1.msra.mxu0 %v862
    %898 = vmatprep.subr.mxu0 0.0
    %899 = vmatpush1.msra.mxu0 %v863
    %900 = vmatprep.subr.mxu0 0.0
    %901 = vmatpush1.msra.mxu0 %v864
    %902 = vmatprep.subr.mxu0 0.0
    %903 = vmatpush1.msra.mxu0 %v865
    %904 = vmatprep.subr.mxu0 0.0
    %905 = vmatpush1.msra.mxu0 %v866
    %906 = vmatprep.subr.mxu0 0.0
    %907 = vmatpush1.msra.mxu0 0.0
    %908 = vmatprep.subr.mxu0 0.0
    %909 = vmatpush1.msra.mxu0 0.0
    %910 = vmatprep.subr.mxu0 0.0
    %911 = vmatpush1.msra.mxu0 0.0
    %912 = vmatprep.subr.mxu0 0.0
    %913 = vmatpush1.msra.mxu0 0.0
    %914 = vmatprep.subr.mxu0 0.0
    %915 = vmatpush1.msra.mxu0 0.0
    %916 = vmatprep.subr.mxu0 0.0
    %917 = vmatpush1.msra.mxu0 0.0
    %918 = vmatprep.subr.mxu0 0.0
    %919 = vmatpush1.msra.mxu0 0.0
    %920 = vmatprep.subr.mxu0 0.0
    %921 = vmatpush1.msra.mxu0 0.0
    %922 = vmatprep.subr.mxu0 0.0
    %923 = vmatpush1.msra.mxu0 0.0
    %924 = vmatprep.subr.mxu0 0.0
    %925 = vmatpush1.msra.mxu0 0.0
    %926 = vmatprep.subr.mxu0 0.0
    %927 = vmatpush1.msra.mxu0 0.0
    %928 = vmatprep.subr.mxu0 0.0
    %929 = vmatpush1.msra.mxu0 0.0
    %930 = vmatprep.subr.mxu0 0.0
    %931 = vmatpush1.msra.mxu0 0.0
    %932 = vmatprep.subr.mxu0 0.0
    %933 = vmatpush1.msra.mxu0 0.0
    %934 = vmatprep.subr.mxu0 0.0
    %935 = vmatpush1.msra.mxu0 0.0
    %936 = vmatprep.subr.mxu0 0.0
    %937 = vmatpush1.msra.mxu0 0.0
    %938 = vmatprep.mubr.f32.mxu0 0.0
    %939 = vmatmul.mubr.f32.gmra.mrb[0].mxu0 %v850
    %v940 = vpop.f32.mrb[0].mxu0
    %v941 = vadd.f32 %v872, %v940
    %v942 = vpop.f32.mrb[0].mxu0
    %943 = vdwg.mxu0
    %944 = vst [vmem:[#allocation2] sm:$0x3] %v941
    // Predicated region
    $region26: #{mlp_forward.1} parent=1 // pred_check
      _
    $region27: #{mlp_forward.1} parent=1 // pred_check_branch
      %946 = sbr.rel (0) target = $region29
    $region28: #{mlp_forward.1} parent=1 // pred_region
      %s948 = ssub.s32 32, 32
      %949 = vsyncadd [#allocation3], %s948
      %s951 = sshll.u32 [#allocation2], 4
      %s952 = int_to_ptr.vmem [resolvable:$true] %s951
      %954 = dma.vmem_to_hbm [thread:$0]  %s952, 32, %s6, [#allocation3]
    $region29: #{mlp_forward.1} parent=1 // pred_fallthru
      _
    // Predicated region
    $region30: #{mlp_forward.1} parent=1 // pred_check
      _
    $region31: #{mlp_forward.1} parent=1 // pred_check_branch
      %956 = sbr.rel (0) target = $region33
    $region32: #{mlp_forward.1} parent=1 // pred_region
      %957 = dma.done [#allocation3], 32
    $region33: #{mlp_forward.1} parent=1 // pred_fallthru
      _
    %958 = vsyncpa [#allocation3], 1

</llo_original>
